<compile_context>
chip_gen: v7x
topology: tpu7x:2x2x1
jax: 0.10.0
libtpu: 0.0.40
codegen_flags: <defaults>
</compile_context>

<pallas_src>
import jax
import jax.numpy as jnp
from jax.experimental import pallas as pl
from jax.experimental.pallas import tpu as pltpu

EPS = 1e-5                         # PyTorch BatchNorm2d default eps
VMEM_LIMIT = 32 * 1024 * 1024      # explicit scoped-VMEM budget (safe on v5e/v6e/v7x)


def _cparams():
    return pltpu.CompilerParams(
        dimension_semantics=("parallel",),
        vmem_limit_bytes=VMEM_LIMIT,
    )


def _pick_tile_m(M):
    """Largest row tile (multiple of 8) dividing M that leaves >= 2 grid steps."""
    for t in (512, 256, 128, 64, 32, 16, 8):
        if M % t == 0 and M // t >= 2:
            return t
    return M


# ---------------- pass 1: conv1 (1x1) + BN1 partial stats ----------------

def _conv1_kernel(x_ref, w_ref, h_ref, st_ref):
    h = jnp.dot(x_ref[...].astype(jnp.bfloat16), w_ref[...],
                preferred_element_type=jnp.float32)
    h_ref[...] = h
    s = jnp.sum(h, axis=0, keepdims=True)
    ss = jnp.sum(h * h, axis=0, keepdims=True)
    st_ref[...] = jnp.concatenate([s, ss], axis=0)[None]


# ------- pass 2: BN1+ReLU -> 3x3 conv (9 accumulated matmuls) + BN2 stats -------

def make_cbr2_kernel(H, W, C):
    HW = H * W

    def kernel(h1_ref, w2_ref, ab_ref, h2_ref, st_ref):
        # folded BN1 (scale/shift) + ReLU
        h = h1_ref[...] * ab_ref[0:1, :] + ab_ref[1:2, :]
        h = jnp.maximum(h, 0.0).reshape(H, W, C)
        # zero-pad H and W by 1 (post-activation domain == Conv2d padding=1)
        zc = jnp.zeros((H, 1, C), jnp.float32)
        hp = jnp.concatenate([zc, h, zc], axis=1)        # (H, W+2, C)
        zr = jnp.zeros((1, W + 2, C), jnp.float32)
        hp = jnp.concatenate([zr, hp, zr], axis=0)       # (H+2, W+2, C)
        # 3x3 conv as 9 accumulated MXU matmuls -- no (M, 9C) im2col slab.
        acc = jnp.zeros((HW, C), jnp.float32)
        for ky in range(3):
            for kx in range(3):
                p = hp[ky:ky + H, kx:kx + W, :].reshape(HW, C)
                acc = acc + jnp.dot(p.astype(jnp.bfloat16), w2_ref[ky * 3 + kx],
                                    preferred_element_type=jnp.float32)
        h2_ref[...] = acc
        s = jnp.sum(acc, axis=0, keepdims=True)
        ss = jnp.sum(acc * acc, axis=0, keepdims=True)
        st_ref[...] = jnp.concatenate([s, ss], axis=0)[None]

    return kernel


# ---------------- pass 3: BN2+ReLU -> conv3 (1x1 -> Cout) + BN3 stats ----------------

def _conv3_kernel(h2_ref, w_ref, ab_ref, h_ref, st_ref):
    h = h2_ref[...] * ab_ref[0:1, :] + ab_ref[1:2, :]
    h = jnp.maximum(h, 0.0)
    h3 = jnp.dot(h.astype(jnp.bfloat16), w_ref[...],
                 preferred_element_type=jnp.float32)
    h_ref[...] = h3
    s = jnp.sum(h3, axis=0, keepdims=True)
    ss = jnp.sum(h3 * h3, axis=0, keepdims=True)
    st_ref[...] = jnp.concatenate([s, ss], axis=0)[None]


# ---------------- pass 4: BN3 + shortcut + ReLU ----------------

def make_final_kernel(H, W, Cout, project, slab):
    def store(out_ref, y):
        if slab:
            out_ref[...] = y.reshape(H, W * Cout)   # lane-dense slab (Cout < 128)
        else:
            out_ref[...] = y                        # direct (rows, Cout) store

    if project:
        def kernel(h3_ref, x_ref, ab_ref, ws_ref, out_ref):
            h = h3_ref[...] * ab_ref[0:1, :] + ab_ref[1:2, :]
            sc = jnp.dot(x_ref[...].astype(jnp.bfloat16), ws_ref[...],
                         preferred_element_type=jnp.float32)
            store(out_ref, jnp.maximum(h + sc, 0.0))
    else:
        def kernel(h3_ref, x_ref, ab_ref, out_ref):
            h = h3_ref[...] * ab_ref[0:1, :] + ab_ref[1:2, :]
            store(out_ref, jnp.maximum(h + x_ref[...], 0.0))

    return kernel


# ---------------- wrapper ----------------

def _fold_bn(partial_stats, g, be, m):
    """Combine per-tile (sum, sumsq) partials into folded BN scale/shift."""
    s = jnp.sum(partial_stats[:, 0, :], axis=0)
    ss = jnp.sum(partial_stats[:, 1, :], axis=0)
    mean = s / m
    var = jnp.maximum(ss / m - mean * mean, 0.0)        # clamp one-pass variance
    scale = jnp.reshape(g, (-1,)) * jax.lax.rsqrt(var + EPS)
    shift = jnp.reshape(be, (-1,)) - mean * scale
    return jnp.stack([scale, shift], axis=0).astype(jnp.float32)   # (2, C)


def resblock_pallas(x_nchw, p):
    x = jnp.transpose(x_nchw, (0, 2, 3, 1)).astype(jnp.float32)    # NCHW -> NHWC
    N, H, W, Cin = x.shape
    C = p["w1"].shape[1]
    Cout = p["w3"].shape[1]
    project = "ws" in p
    M = N * H * W
    HW = H * W
    x2d = x.reshape(M, Cin)

    w1b = p["w1"].astype(jnp.bfloat16)                    # (Cin, C)
    w2b = p["w2"].reshape(9, C, C).astype(jnp.bfloat16)   # (ky*3+kx, Cin, Cout)
    w3b = p["w3"].astype(jnp.bfloat16)                    # (C, Cout)

    tile_m = _pick_tile_m(M)
    T = M // tile_m

    # ---- pass 1: conv1 + BN1 partial stats (grid over M-row tiles) ----
    h1_raw, st1 = pl.pallas_call(
        _conv1_kernel,
        grid=(T,),
        in_specs=[pl.BlockSpec((tile_m, Cin), lambda i: (i, 0)),
                  pl.BlockSpec((Cin, C), lambda i: (0, 0))],
        out_specs=(pl.BlockSpec((tile_m, C), lambda i: (i, 0)),
                   pl.BlockSpec((1, 2, C), lambda i: (i, 0, 0))),
        out_shape=(jax.ShapeDtypeStruct((M, C), jnp.float32),
                   jax.ShapeDtypeStruct((T, 2, C), jnp.float32)),
        compiler_params=_cparams(),
        cost_estimate=pl.CostEstimate(flops=2 * M * Cin * C, transcendentals=0,
                                      bytes_accessed=4 * M * (Cin + C)),
    )(x2d, w1b)
    ab1 = _fold_bn(st1, p["g1"], p["be1"], M)

    # ---- pass 2: BN1+ReLU -> 3x3 conv + BN2 partial stats (grid over images) ----
    h2_raw, st2 = pl.pallas_call(
        make_cbr2_kernel(H, W, C),
        grid=(N,),
        in_specs=[pl.BlockSpec((HW, C), lambda n: (n, 0)),
                  pl.BlockSpec((9, C, C), lambda n: (0, 0, 0)),
                  pl.BlockSpec((2, C), lambda n: (0, 0))],
        out_specs=(pl.BlockSpec((HW, C), lambda n: (n, 0)),
                   pl.BlockSpec((1, 2, C), lambda n: (n, 0, 0))),
        out_shape=(jax.ShapeDtypeStruct((M, C), jnp.float32),
                   jax.ShapeDtypeStruct((N, 2, C), jnp.float32)),
        compiler_params=_cparams(),
        cost_estimate=pl.CostEstimate(flops=2 * M * 9 * C * C, transcendentals=0,
                                      bytes_accessed=4 * M * 2 * C),
    )(h1_raw, w2b, ab1)
    ab2 = _fold_bn(st2, p["g2"], p["be2"], M)

    # ---- pass 3: BN2+ReLU -> conv3 + BN3 partial stats (grid over M-row tiles) ----
    h3_raw, st3 = pl.pallas_call(
        _conv3_kernel,
        grid=(T,),
        in_specs=[pl.BlockSpec((tile_m, C), lambda i: (i, 0)),
                  pl.BlockSpec((C, Cout), lambda i: (0, 0)),
                  pl.BlockSpec((2, C), lambda i: (0, 0))],
        out_specs=(pl.BlockSpec((tile_m, Cout), lambda i: (i, 0)),
                   pl.BlockSpec((1, 2, Cout), lambda i: (i, 0, 0))),
        out_shape=(jax.ShapeDtypeStruct((M, Cout), jnp.float32),
                   jax.ShapeDtypeStruct((T, 2, Cout), jnp.float32)),
        compiler_params=_cparams(),
        cost_estimate=pl.CostEstimate(flops=2 * M * C * Cout, transcendentals=0,
                                      bytes_accessed=4 * M * (C + Cout)),
    )(h2_raw, w3b, ab2)
    ab3 = _fold_bn(st3, p["g3"], p["be3"], M)
    if project:
        # projection bias is not batch-normed -> fold it into the BN3 shift
        ab3 = ab3.at[1, :].add(jnp.reshape(p["bs"], (-1,)))

    # ---- pass 4: BN3 + shortcut + ReLU (grid over images) ----
    slab = (Cout % 128 != 0) and (H % 8 == 0)
    if slab:
        out_shape = jax.ShapeDtypeStruct((N * H, W * Cout), jnp.float32)
        out_spec = pl.BlockSpec((H, W * Cout), lambda n: (n, 0))
    else:
        out_shape = jax.ShapeDtypeStruct((M, Cout), jnp.float32)
        out_spec = pl.BlockSpec((HW, Cout), lambda n: (n, 0))

    in_specs = [pl.BlockSpec((HW, Cout), lambda n: (n, 0)),
                pl.BlockSpec((HW, Cin), lambda n: (n, 0)),
                pl.BlockSpec((2, Cout), lambda n: (0, 0))]
    args = [h3_raw, x2d, ab3]
    if project:
        in_specs.append(pl.BlockSpec((Cin, Cout), lambda n: (0, 0)))
        args.append(p["ws"].astype(jnp.bfloat16))

    out = pl.pallas_call(
        make_final_kernel(H, W, Cout, project, slab),
        grid=(N,),
        in_specs=in_specs,
        out_specs=out_spec,
        out_shape=out_shape,
        compiler_params=_cparams(),
        cost_estimate=pl.CostEstimate(
            flops=(2 * M * Cin * Cout) if project else (M * Cout),
            transcendentals=0,
            bytes_accessed=4 * M * (Cin + 2 * Cout)),
    )(*args)

    out = out.reshape(N, H, W, Cout)
    return jnp.transpose(out, (0, 3, 1, 2))                         # NHWC -> NCHW


# ---------------- params / reference / test ----------------

def init_params(key, channel_in, channel_out):
    c = channel_out // 4
    ks = jax.random.split(key, 14)

    def w(k, shape, scale=0.2):
        return (scale * jax.random.normal(k, shape)).astype(jnp.float32)

    p = dict(
        w1=w(ks[0], (channel_in, c)),         b1=w(ks[1], (1, c)),
        g1=1.0 + w(ks[2], (1, c)),            be1=w(ks[3], (1, c)),
        w2=w(ks[4], (3, 3, c, c)),            b2=w(ks[5], (1, c)),
        g2=1.0 + w(ks[6], (1, c)),            be2=w(ks[7], (1, c)),
        w3=w(ks[8], (c, channel_out)),        b3=w(ks[9], (1, channel_out)),
        g3=1.0 + w(ks[10], (1, channel_out)), be3=w(ks[11], (1, channel_out)),
    )
    if channel_in != channel_out:
        p["ws"] = w(ks[12], (channel_in, channel_out))
        p["bs"] = w(ks[13], (1, channel_out))
    return p


def resblock_ref(x_nchw, p):
    """Pure-JAX reference (lax.conv). Conv operands cast to bf16 to mirror the
    kernel's bf16 MXU operands (f32 accumulation); BN / elementwise in f32."""
    x = jnp.transpose(x_nchw, (0, 2, 3, 1)).astype(jnp.float32)
    Cin = x.shape[-1]
    C = p["w1"].shape[1]
    Cout = p["w3"].shape[1]

    def conv(inp, w_hwio, b, padding):
        y = jax.lax.conv_general_dilated(
            inp.astype(jnp.bfloat16), w_hwio.astype(jnp.bfloat16),
            window_strides=(1, 1), padding=padding,
            dimension_numbers=("NHWC", "HWIO", "NHWC"),
            preferred_element_type=jnp.float32)
        return y + b.reshape(1, 1, 1, -1)

    def bn(h, g, be):
        mean = jnp.mean(h, axis=(0, 1, 2), keepdims=True)
        var = jnp.mean(jnp.square(h - mean), axis=(0, 1, 2), keepdims=True)
        return ((h - mean) * jax.lax.rsqrt(var + EPS)
                * g.reshape(1, 1, 1, -1) + be.reshape(1, 1, 1, -1))

    h = conv(x, p["w1"].reshape(1, 1, Cin, C), p["b1"], "VALID")
    h = jax.nn.relu(bn(h, p["g1"], p["be1"]))
    h = conv(h, p["w2"], p["b2"], [(1, 1), (1, 1)])
    h = jax.nn.relu(bn(h, p["g2"], p["be2"]))
    h = conv(h, p["w3"].reshape(1, 1, C, Cout), p["b3"], "VALID")
    h = bn(h, p["g3"], p["be3"])
    if "ws" in p:
        sc = conv(x, p["ws"].reshape(1, 1, Cin, Cout), p["bs"], "VALID")
    else:
        sc = x
    return jnp.transpose(jax.nn.relu(h + sc), (0, 3, 1, 2))


if __name__ == "__main__":
    key = jax.random.PRNGKey(0)
    kx, kp = jax.random.split(key)

    channel_in, channel_out = 4, 16          # channel = channel_out // 4 = 4
    x = jax.random.normal(kx, (2, channel_in, 16, 16), dtype=jnp.float32)  # NCHW
    params = init_params(kp, channel_in, channel_out)

    y = jax.block_until_ready(resblock_pallas(x, params))
    y_ref = jax.block_until_ready(resblock_ref(x, params))

    assert y.shape == (2, channel_out, 16, 16), y.shape
    # Tolerance accounts for bf16 operand re-rounding of intermediate
    # activations; both sides use bf16 MXU operands with f32 accumulation.
    if not jnp.allclose(y, y_ref, atol=2e-2, rtol=2e-2):
        raise AssertionError(
            f"mismatch vs reference, max abs err = {float(jnp.max(jnp.abs(y - y_ref)))}")
    print("KERNEL_OK")
</pallas_src>

<mosaic_0001>
module attributes {stable_mosaic.version = 11 : i64} {
  func.func @_conv1_kernel(%arg0: i32, %arg1: memref<256x4xf32, #tpu.memory_space<vmem>>, %arg2: memref<4x4xbf16, #tpu.memory_space<vmem>>, %arg3: memref<256x4xf32, #tpu.memory_space<vmem>>, %arg4: memref<1x2x4xf32, #tpu.memory_space<vmem>>) attributes {dimension_semantics = [#tpu.dimension_semantics<parallel>], iteration_bounds = array<i64: 2>, scalar_prefetch = 0 : i64, scratch_operands = 0 : i64, tpu.core_type = #tpu.core_type<tc>, window_params = [{transform_indices = @transform_0, window_bounds = array<i64: 256, 4>}, {pipeline_mode = #tpu.pipeline_mode<synchronous>, transform_indices = @transform_1, window_bounds = array<i64: 4, 4>}, {transform_indices = @transform_2, window_bounds = array<i64: 256, 4>}, {transform_indices = @transform_3, window_bounds = array<i64: 1, 2, 4>}]} {
    %c0 = arith.constant 0 : index
    %c0_0 = arith.constant 0 : index
    %0 = vector.load %arg1[%c0, %c0_0] : memref<256x4xf32, #tpu.memory_space<vmem>>, vector<256x4xf32>
    %1 = arith.truncf %0 : vector<256x4xf32> to vector<256x4xbf16>
    %c0_1 = arith.constant 0 : index
    %c0_2 = arith.constant 0 : index
    %2 = vector.load %arg2[%c0_1, %c0_2] : memref<4x4xbf16, #tpu.memory_space<vmem>>, vector<4x4xbf16>
    %cst = arith.constant dense<0.000000e+00> : vector<256x4xf32>
    %3 = tpu.matmul %1, %2, %cst {dimension_numbers = #tpu.dot_dimension_numbers<[1], [0], [0], [1], [0, 0, 1, 1], [], []>} : vector<256x4xbf16>, vector<4x4xbf16>, vector<256x4xf32> -> vector<256x4xf32>
    %c0_3 = arith.constant 0 : index
    %c0_4 = arith.constant 0 : index
    %4 = vector.load %arg3[%c0_3, %c0_4] : memref<256x4xf32, #tpu.memory_space<vmem>>, vector<256x4xf32>
    tpu.vector_store %arg3[%c0_3, %c0_4], %3 {strides = array<i32>} : memref<256x4xf32, #tpu.memory_space<vmem>>, vector<256x4xf32>,
    %cst_5 = arith.constant dense<0.000000e+00> : vector<4xf32>
    %5 = vector.multi_reduction <add>, %3, %cst_5 [0] : vector<256x4xf32> to vector<4xf32>
    %6 = vector.shape_cast %5 : vector<4xf32> to vector<1x4xf32>
    %7 = arith.mulf %3, %3 : vector<256x4xf32>
    %cst_6 = arith.constant dense<0.000000e+00> : vector<4xf32>
    %8 = vector.multi_reduction <add>, %7, %cst_6 [0] : vector<256x4xf32> to vector<4xf32>
    %9 = vector.shape_cast %8 : vector<4xf32> to vector<1x4xf32>
    %10 = tpu.concatenate %6, %9 in 0 : vector<1x4xf32>, vector<1x4xf32> -> vector<2x4xf32>
    %11 = vector.shape_cast %10 : vector<2x4xf32> to vector<1x2x4xf32>
    %c0_7 = arith.constant 0 : index
    %c0_8 = arith.constant 0 : index
    %c0_9 = arith.constant 0 : index
    %12 = vector.load %arg4[%c0_7, %c0_8, %c0_9] : memref<1x2x4xf32, #tpu.memory_space<vmem>>, vector<1x2x4xf32>
    tpu.vector_store %arg4[%c0_7, %c0_8, %c0_9], %11 {strides = array<i32>} : memref<1x2x4xf32, #tpu.memory_space<vmem>>, vector<1x2x4xf32>,
    return
  }
  func.func @transform_0(%arg0: i32) -> (i32, i32) {
    %c0_i32 = arith.constant 0 : i32
    %c0_i32_0 = arith.constant 0 : i32
    return %arg0, %c0_i32 : i32, i32
  }
  func.func @transform_1(%arg0: i32) -> (i32, i32) {
    %c0_i32 = arith.constant 0 : i32
    %c0_i32_0 = arith.constant 0 : i32
    %c0_i32_1 = arith.constant 0 : i32
    return %c0_i32, %c0_i32_0 : i32, i32
  }
  func.func @transform_2(%arg0: i32) -> (i32, i32) {
    %c0_i32 = arith.constant 0 : i32
    %c0_i32_0 = arith.constant 0 : i32
    return %arg0, %c0_i32 : i32, i32
  }
  func.func @transform_3(%arg0: i32) -> (i32, i32, i32) {
    %c0_i32 = arith.constant 0 : i32
    %c0_i32_0 = arith.constant 0 : i32
    %c0_i32_1 = arith.constant 0 : i32
    return %arg0, %c0_i32, %c0_i32_0 : i32, i32, i32
  }
}

</mosaic_0001>

<llo_original>
// kernel: tpu_custom_call.1
$region0: #{tpu_custom_call.1}
  #allocation0 [shape = 'u32[]', space=smem, size = 0x4, offset = 0x4, fixed_abs, tag = 'smem constant byte address 0x4 - core index']
  #allocation1 [shape = 'u32[144,128]{1,0:T(1,128)}', space=vmem, size = 0x12000, scoped, tag = 'internal scratch']
  %s0 = inlined_call_operand.vmem [shape: f32[512,4], index: 0, kind: input, shape index: {}]
  %s1 = inlined_call_operand.vmem [shape: bf16[4,4], index: 1, kind: input, shape index: {}]
  %s2 = inlined_call_operand.vmem [shape: f32[512,4], index: 2, kind: output, shape index: {0}]
  %s3 = inlined_call_operand.hbm [shape: f32[2,2,4], index: 3, kind: output, shape index: {1}]
  %4 = xla_tuple %s2, %s3
  %s5 = sld [smem:[#allocation0]]
  $region49: #{tpu_custom_call.1} parent=0
    _
  %s7 = ssub.s32 1, %s5
  %s8 = scalar_select 0, %s7, %s5
  $region1: #{tpu_custom_call.1} parent=0
    #allocation2 [shape = 'u8[2048]{0}', space=vmem, size = 0x800, scoped, tag = 'output window, operand 1']
    #allocation3 [shape = 's32[2]{0}', space=sflag, size = 0x8, scoped, tag = 'scoped memory for tpu_custom_call.1']
    %9 = vsyncpa [#allocation3], 0
    %s10 = scalar_lea.sflag [#allocation3], 1
    %11 = vsyncpa %s10, 0
    loop: start=0, step=1, limit=4
    $region2: #{tpu_custom_call.1} parent=1 // loop_pre_header
      _
    $region3: #{tpu_custom_call.1} parent=1 // loop_header
      %s13 = sphi 0, %s17
      %p14 = scmp.ge.s32.totalorder %s13, 4
      %s23 = sphi 0, %s25
      %s26 = sphi 0, %s23
      %s27 = sphi 0, %s26
      %s43 = sphi 0, %s27
      %s47 = sphi 0, %s47
      %s49 = sphi 0, %s47
      %s50 = sphi 0, %s49
      %s64 = sphi 0, %s50
      %s70 = sphi 0, %s72
      %s73 = sphi 0, %s70
      %s74 = sphi 0, %s73
      %s90 = sphi 0, %s74
      %s96 = sphi 0, %s98
      %s99 = sphi 0, %s96
      %s100 = sphi 0, %s99
      %s116 = sphi 0, %s100
    $region4: #{tpu_custom_call.1} parent=1 // loop_header_branch
      %16 = sbr.rel (%p14) target = $region8
    $region5: #{tpu_custom_call.1} parent=1 // loop_body
      %s18 = ssub.s32 %s13, 1
      %s19 = ssub.s32 %s13, 2
      %s20 = sadd.s32 %s13, 1
      %s21 = ssub.s32 %s13, %s20
      %p22 = scmp.eq.s32.totalorder %s21, 0
      %s24 = sadd.s32 %s23, 1
      %s25 = scalar_select %p22, %s23, %s24
      %p28 = pneg %p22
      %p29 = scmp.eq.s32.totalorder %s13, 1
      %p30 = por %p28, %p29
      %p31 = scmp.ne.s32.totalorder %s23, %s26
      %p32 = scmp.eq.s32.totalorder %s13, 0
      %p33 = por %p31, %p32
      %p34 = scmp.ne.s32.totalorder %s23, %s26
      %p35 = scmp.eq.s32.totalorder %s18, 1
      %p36 = por %p34, %p35
      %p37 = scmp.ne.s32.totalorder %s26, %s27
      %p38 = scmp.eq.s32.totalorder %s18, 0
      %p39 = por %p37, %p38
      %p40 = scmp.ne.s32.totalorder %s26, %s27
      %p41 = scmp.eq.s32.totalorder %s19, 1
      %p42 = por %p40, %p41
      %p44 = scmp.ne.s32.totalorder %s27, %s43
      %p45 = scmp.eq.s32.totalorder %s19, 0
      %p46 = por %p44, %p45
      %s48 = sadd.s32 %s47, 1
      %p51 = scmp.eq.s32.totalorder %s13, 1
      %p52 = scmp.ne.s32.totalorder %s47, %s49
      %p53 = scmp.eq.s32.totalorder %s13, 0
      %p54 = por %p52, %p53
      %p55 = scmp.ne.s32.totalorder %s47, %s49
      %p56 = scmp.eq.s32.totalorder %s18, 1
      %p57 = por %p55, %p56
      %p58 = scmp.ne.s32.totalorder %s49, %s50
      %p59 = scmp.eq.s32.totalorder %s18, 0
      %p60 = por %p58, %p59
      %p61 = scmp.ne.s32.totalorder %s49, %s50
      %p62 = scmp.eq.s32.totalorder %s19, 1
      %p63 = por %p61, %p62
      %p65 = scmp.ne.s32.totalorder %s50, %s64
      %p66 = scmp.eq.s32.totalorder %s19, 0
      %p67 = por %p65, %p66
      %s68 = ssub.s32 %s13, %s20
      %p69 = scmp.eq.s32.totalorder %s68, 0
      %s71 = sadd.s32 %s70, 1
      %s72 = scalar_select %p69, %s70, %s71
      %p75 = pneg %p69
      %p76 = scmp.eq.s32.totalorder %s13, 1
      %p77 = por %p75, %p76
      %p78 = scmp.ne.s32.totalorder %s70, %s73
      %p79 = scmp.eq.s32.totalorder %s13, 0
      %p80 = por %p78, %p79
      %p81 = scmp.ne.s32.totalorder %s70, %s73
      %p82 = scmp.eq.s32.totalorder %s18, 1
      %p83 = por %p81, %p82
      %p84 = scmp.ne.s32.totalorder %s73, %s74
      %p85 = scmp.eq.s32.totalorder %s18, 0
      %p86 = por %p84, %p85
      %p87 = scmp.ne.s32.totalorder %s73, %s74
      %p88 = scmp.eq.s32.totalorder %s19, 1
      %p89 = por %p87, %p88
      %p91 = scmp.ne.s32.totalorder %s74, %s90
      %p92 = scmp.eq.s32.totalorder %s19, 0
      %p93 = por %p91, %p92
      %s94 = ssub.s32 %s13, %s20
      %p95 = scmp.eq.s32.totalorder %s94, 0
      %s97 = sadd.s32 %s96, 1
      %s98 = scalar_select %p95, %s96, %s97
      %p101 = pneg %p95
      %p102 = scmp.eq.s32.totalorder %s13, 1
      %p103 = por %p101, %p102
      %p104 = scmp.ne.s32.totalorder %s96, %s99
      %p105 = scmp.eq.s32.totalorder %s13, 0
      %p106 = por %p104, %p105
      %p107 = scmp.ne.s32.totalorder %s96, %s99
      %p108 = scmp.eq.s32.totalorder %s18, 1
      %p109 = por %p107, %p108
      %p110 = scmp.ne.s32.totalorder %s99, %s100
      %p111 = scmp.eq.s32.totalorder %s18, 0
      %p112 = por %p110, %p111
      %p113 = scmp.ne.s32.totalorder %s99, %s100
      %p114 = scmp.eq.s32.totalorder %s19, 1
      %p115 = por %p113, %p114
      %p117 = scmp.ne.s32.totalorder %s100, %s116
      %p118 = scmp.eq.s32.totalorder %s19, 0
      %p119 = por %p117, %p118
      %p120 = scmp.le.s32.totalorder 1, %s13
      %p121 = scmp.lt.s32.totalorder %s13, 3
      %p122 = pnand %p120, %p121
      %p123 = pneg %p122
      // Predicated region
      $region9: #{tpu_custom_call.1} parent=5 // pred_check
        _
      $region10: #{tpu_custom_call.1} parent=5 // pred_check_branch
        %125 = sbr.rel (%p122) target = $region12
      $region11: #{tpu_custom_call.1} parent=5 // pred_region
        %s126 = ssub.s32 %s13, 1
        // Predicated region
        $region13: #{tpu_custom_call.1} parent=11 // pred_check
          %p127 = pneg %p60
        $region14: #{tpu_custom_call.1} parent=11 // pred_check_branch
          %129 = sbr.rel (%p127) target = $region16
        $region15: #{tpu_custom_call.1} parent=11 // pred_region
          _
        $region16: #{tpu_custom_call.1} parent=11 // pred_fallthru
          _
      $region12: #{tpu_custom_call.1} parent=5 // pred_fallthru
        _
      %p130 = scmp.lt.s32.totalorder %s13, 2
      // Predicated region
      $region17: #{tpu_custom_call.1} parent=5 // pred_check
        %p131 = pneg %p130
      $region18: #{tpu_custom_call.1} parent=5 // pred_check_branch
        %133 = sbr.rel (%p131) target = $region20
      $region19: #{tpu_custom_call.1} parent=5 // pred_region
        // Predicated region
        $region21: #{tpu_custom_call.1} parent=19 // pred_check
          %p134 = pneg %p33
        $region22: #{tpu_custom_call.1} parent=19 // pred_check_branch
          %136 = sbr.rel (%p134) target = $region24
        $region23: #{tpu_custom_call.1} parent=19 // pred_region
          %s137 = smul.u32 32, %s13
          %p138 = scmp.lt.s32.totalorder %s137, 63
          %s139 = scalar_select %p138, %s137, 63
          %s140 = smul.addr %s139, 8
          %s141 = scalar_lea.vmem %s0, %s140
          %s142 = smul.u32 32, %s13
        $region24: #{tpu_custom_call.1} parent=19 // pred_fallthru
          _
      $region20: #{tpu_custom_call.1} parent=5 // pred_fallthru
        _
      %p143 = scmp.le.s32.totalorder 1, %s13
      %p144 = scmp.lt.s32.totalorder %s13, 3
      %p145 = pnand %p143, %p144
      %p146 = pneg %p145
      // Predicated region
      $region25: #{tpu_custom_call.1} parent=5 // pred_check
        _
      $region26: #{tpu_custom_call.1} parent=5 // pred_check_branch
        %148 = sbr.rel (%p145) target = $region28
      $region27: #{tpu_custom_call.1} parent=5 // pred_region
        %s149 = ssub.s32 %s13, 1
        %s150 = smul.u32 32, %s18
        %p151 = scmp.lt.s32.totalorder %s150, 63
        %s152 = scalar_select %p151, %s150, 63
        %s153 = smul.addr %s152, 8
        %s154 = scalar_lea.vmem %s0, %s153
        %p155 = pneg %p39
        %p156 = pneg %p36
        %p157 = pneg %p60
        %p158 = pneg %p57
        %p159 = pneg %p86
        %p160 = pneg %p83
        %s161 = smul.u32 32, %s18
        %p162 = scmp.lt.s32.totalorder %s161, 63
        %s163 = scalar_select %p162, %s161, 63
        %s164 = smul.addr %s163, 8
        %s165 = scalar_lea.vmem %s2, %s164
        %p166 = pneg %p112
        %p167 = pneg %p109
        %s168 = sand.u32 %s99, 1
        %s169 = scalar_lea.sflag [#allocation3], %s168
        %s170 = sand.u32 %s99, 1
        %s171 = smul.addr %s170, 2
        %s172 = scalar_lea.vmem [#allocation2], %s171
        %s173 = smul.u32 32, %s18
        %p174 = scmp.lt.s32.totalorder %s173, 63
        %s175 = scalar_select %p174, %s173, 63
        %s176 = smul.addr %s175, 8
        %s177 = scalar_lea.vmem %s0, %s176
        %s178 = smul.u32 32, %s18
        %s179 = smul.u32 32, %s18
        %p180 = scmp.lt.s32.totalorder %s179, 63
        %s181 = scalar_select %p180, %s179, 63
        %s182 = smul.addr %s181, 8
        %s183 = scalar_lea.vmem %s2, %s182
        %s184 = smul.u32 32, %s18
        %v186 = vld [vmem:[%s177] sm:$0xff]
        %v187 = vld [vmem:[%s177 + $0x8] sm:$0xff]
        %v188 = vld [vmem:[%s177 + $0x10] sm:$0xff]
        %v189 = vld [vmem:[%s177 + $0x18] sm:$0xff]
        %v190 = vld [vmem:[%s177 + $0x20] sm:$0xff]
        %v191 = vld [vmem:[%s177 + $0x28] sm:$0xff]
        %v192 = vld [vmem:[%s177 + $0x30] sm:$0xff]
        %v193 = vld [vmem:[%s177 + $0x38] sm:$0xff]
        %v194 = vld [vmem:[%s177 + $0x40] sm:$0xff]
        %v195 = vld [vmem:[%s177 + $0x48] sm:$0xff]
        %v196 = vld [vmem:[%s177 + $0x50] sm:$0xff]
        %v197 = vld [vmem:[%s177 + $0x58] sm:$0xff]
        %v198 = vld [vmem:[%s177 + $0x60] sm:$0xff]
        %v199 = vld [vmem:[%s177 + $0x68] sm:$0xff]
        %v200 = vld [vmem:[%s177 + $0x70] sm:$0xff]
        %v201 = vld [vmem:[%s177 + $0x78] sm:$0xff]
        %v202 = vld [vmem:[%s177 + $0x80] sm:$0xff]
        %v203 = vld [vmem:[%s177 + $0x88] sm:$0xff]
        %v204 = vld [vmem:[%s177 + $0x90] sm:$0xff]
        %v205 = vld [vmem:[%s177 + $0x98] sm:$0xff]
        %v206 = vld [vmem:[%s177 + $0xa0] sm:$0xff]
        %v207 = vld [vmem:[%s177 + $0xa8] sm:$0xff]
        %v208 = vld [vmem:[%s177 + $0xb0] sm:$0xff]
        %v209 = vld [vmem:[%s177 + $0xb8] sm:$0xff]
        %v210 = vld [vmem:[%s177 + $0xc0] sm:$0xff]
        %v211 = vld [vmem:[%s177 + $0xc8] sm:$0xff]
        %v212 = vld [vmem:[%s177 + $0xd0] sm:$0xff]
        %v213 = vld [vmem:[%s177 + $0xd8] sm:$0xff]
        %v214 = vld [vmem:[%s177 + $0xe0] sm:$0xff]
        %v215 = vld [vmem:[%s177 + $0xe8] sm:$0xff]
        %v216 = vld [vmem:[%s177 + $0xf0] sm:$0xff]
        %v217 = vld [vmem:[%s177 + $0xf8] sm:$0xff]
        %v218 = vpack.c.bf16 %v187, %v186
        %v219 = vpack.c.bf16 %v189, %v188
        %v220 = vpack.c.bf16 %v191, %v190
        %v221 = vpack.c.bf16 %v193, %v192
        %v222 = vpack.c.bf16 %v195, %v194
        %v223 = vpack.c.bf16 %v197, %v196
        %v224 = vpack.c.bf16 %v199, %v198
        %v225 = vpack.c.bf16 %v201, %v200
        %v226 = vpack.c.bf16 %v203, %v202
        %v227 = vpack.c.bf16 %v205, %v204
        %v228 = vpack.c.bf16 %v207, %v206
        %v229 = vpack.c.bf16 %v209, %v208
        %v230 = vpack.c.bf16 %v211, %v210
        %v231 = vpack.c.bf16 %v213, %v212
        %v232 = vpack.c.bf16 %v215, %v214
        %v233 = vpack.c.bf16 %v217, %v216
        %v234 = vld [vmem:[%s1] sm:$0x3]
        %vm235 = vcmask 31744
        %v237 = vsel %vm235, %v218, 0
        %v240 = vsel %vm235, %v219, 0
        %v243 = vsel %vm235, %v220, 0
        %v246 = vsel %vm235, %v221, 0
        %v249 = vsel %vm235, %v222, 0
        %v252 = vsel %vm235, %v223, 0
        %v255 = vsel %vm235, %v224, 0
        %v258 = vsel %vm235, %v225, 0
        %v261 = vsel %vm235, %v226, 0
        %v264 = vsel %vm235, %v227, 0
        %v267 = vsel %vm235, %v228, 0
        %v270 = vsel %vm235, %v229, 0
        %v273 = vsel %vm235, %v230, 0
        %v276 = vsel %vm235, %v231, 0
        %v279 = vsel %vm235, %v232, 0
        %v282 = vsel %vm235, %v233, 0
        %vm284 = vcmask 1041408
        %v286 = vsel %vm284, %v234, 0
        %288 = vmatprep.subr.bf16.mxu0 0
        %289 = vmatpush1.bf16.msra.mxu0 %v286
        %290 = vmatprep.subr.bf16.mxu0 0
        %291 = vmatpush1.bf16.msra.mxu0 0
        %292 = vmatprep.subr.bf16.mxu0 0
        %293 = vmatpush1.bf16.msra.mxu0 0
        %294 = vmatprep.subr.bf16.mxu0 0
        %295 = vmatpush1.bf16.msra.mxu0 0
        %296 = vmatprep.subr.bf16.mxu0 0
        %297 = vmatpush1.bf16.msra.mxu0 0
        %298 = vmatprep.subr.bf16.mxu0 0
        %299 = vmatpush1.bf16.msra.mxu0 0
        %300 = vmatprep.subr.bf16.mxu0 0
        %301 = vmatpush1.bf16.msra.mxu0 0
        %302 = vmatprep.subr.bf16.mxu0 0
        %303 = vmatpush1.bf16.msra.mxu0 0
        %304 = vmatprep.subr.bf16.mxu0 0
        %305 = vmatpush1.bf16.msra.mxu0 0
        %306 = vmatprep.subr.bf16.mxu0 0
        %307 = vmatpush1.bf16.msra.mxu0 0
        %308 = vmatprep.subr.bf16.mxu0 0
        %309 = vmatpush1.bf16.msra.mxu0 0
        %310 = vmatprep.subr.bf16.mxu0 0
        %311 = vmatpush1.bf16.msra.mxu0 0
        %312 = vmatprep.subr.bf16.mxu0 0
        %313 = vmatpush1.bf16.msra.mxu0 0
        %314 = vmatprep.subr.bf16.mxu0 0
        %315 = vmatpush1.bf16.msra.mxu0 0
        %316 = vmatprep.subr.bf16.mxu0 0
        %317 = vmatpush1.bf16.msra.mxu0 0
        %318 = vmatprep.subr.bf16.mxu0 0
        %319 = vmatpush1.bf16.msra.mxu0 0
        %320 = vmatprep.mubr.bf16.mxu0 0
        %321 = vmatmul.mubr.bf16.gmra.mrb[0].mxu0 %v237
        %v322 = vpop.f32.mrb[0].mxu0
        %v323 = vadd.f32 0.0, %v322
        %v324 = vpop.f32.mrb[0].mxu0
        %v325 = vpop.f32.mrb[0].mxu0
        %v326 = vadd.f32 0.0, %v325
        %v327 = vpop.f32.mrb[0].mxu0
        %328 = vmatprep.mubr.bf16.mxu0 0
        %329 = vmatmul.mubr.bf16.gmra.mrb[0].mxu0 %v240
        %v330 = vpop.f32.mrb[0].mxu0
        %v331 = vadd.f32 0.0, %v330
        %v332 = vpop.f32.mrb[0].mxu0
        %v333 = vpop.f32.mrb[0].mxu0
        %v334 = vadd.f32 0.0, %v333
        %v335 = vpop.f32.mrb[0].mxu0
        %336 = vmatprep.mubr.bf16.mxu0 0
        %337 = vmatmul.mubr.bf16.gmra.mrb[0].mxu0 %v243
        %v338 = vpop.f32.mrb[0].mxu0
        %v339 = vadd.f32 0.0, %v338
        %v340 = vpop.f32.mrb[0].mxu0
        %v341 = vpop.f32.mrb[0].mxu0
        %v342 = vadd.f32 0.0, %v341
        %v343 = vpop.f32.mrb[0].mxu0
        %344 = vmatprep.mubr.bf16.mxu0 0
        %345 = vmatmul.mubr.bf16.gmra.mrb[0].mxu0 %v246
        %v346 = vpop.f32.mrb[0].mxu0
        %v347 = vadd.f32 0.0, %v346
        %v348 = vpop.f32.mrb[0].mxu0
        %v349 = vpop.f32.mrb[0].mxu0
        %v350 = vadd.f32 0.0, %v349
        %v351 = vpop.f32.mrb[0].mxu0
        %352 = vmatprep.mubr.bf16.mxu0 0
        %353 = vmatmul.mubr.bf16.gmra.mrb[0].mxu0 %v249
        %v354 = vpop.f32.mrb[0].mxu0
        %v355 = vadd.f32 0.0, %v354
        %v356 = vpop.f32.mrb[0].mxu0
        %v357 = vpop.f32.mrb[0].mxu0
        %v358 = vadd.f32 0.0, %v357
        %v359 = vpop.f32.mrb[0].mxu0
        %360 = vmatprep.mubr.bf16.mxu0 0
        %361 = vmatmul.mubr.bf16.gmra.mrb[0].mxu0 %v252
        %v362 = vpop.f32.mrb[0].mxu0
        %v363 = vadd.f32 0.0, %v362
        %v364 = vpop.f32.mrb[0].mxu0
        %v365 = vpop.f32.mrb[0].mxu0
        %v366 = vadd.f32 0.0, %v365
        %v367 = vpop.f32.mrb[0].mxu0
        %368 = vmatprep.mubr.bf16.mxu0 0
        %369 = vmatmul.mubr.bf16.gmra.mrb[0].mxu0 %v255
        %v370 = vpop.f32.mrb[0].mxu0
        %v371 = vadd.f32 0.0, %v370
        %v372 = vpop.f32.mrb[0].mxu0
        %v373 = vpop.f32.mrb[0].mxu0
        %v374 = vadd.f32 0.0, %v373
        %v375 = vpop.f32.mrb[0].mxu0
        %376 = vmatprep.mubr.bf16.mxu0 0
        %377 = vmatmul.mubr.bf16.gmra.mrb[0].mxu0 %v258
        %v378 = vpop.f32.mrb[0].mxu0
        %v379 = vadd.f32 0.0, %v378
        %v380 = vpop.f32.mrb[0].mxu0
        %v381 = vpop.f32.mrb[0].mxu0
        %v382 = vadd.f32 0.0, %v381
        %v383 = vpop.f32.mrb[0].mxu0
        %384 = vmatprep.mubr.bf16.mxu0 0
        %385 = vmatmul.mubr.bf16.gmra.mrb[0].mxu0 %v261
        %v386 = vpop.f32.mrb[0].mxu0
        %v387 = vadd.f32 0.0, %v386
        %v388 = vpop.f32.mrb[0].mxu0
        %v389 = vpop.f32.mrb[0].mxu0
        %v390 = vadd.f32 0.0, %v389
        %v391 = vpop.f32.mrb[0].mxu0
        %392 = vmatprep.mubr.bf16.mxu0 0
        %393 = vmatmul.mubr.bf16.gmra.mrb[0].mxu0 %v264
        %v394 = vpop.f32.mrb[0].mxu0
        %v395 = vadd.f32 0.0, %v394
        %v396 = vpop.f32.mrb[0].mxu0
        %v397 = vpop.f32.mrb[0].mxu0
        %v398 = vadd.f32 0.0, %v397
        %v399 = vpop.f32.mrb[0].mxu0
        %400 = vmatprep.mubr.bf16.mxu0 0
        %401 = vmatmul.mubr.bf16.gmra.mrb[0].mxu0 %v267
        %v402 = vpop.f32.mrb[0].mxu0
        %v403 = vadd.f32 0.0, %v402
        %v404 = vpop.f32.mrb[0].mxu0
        %v405 = vpop.f32.mrb[0].mxu0
        %v406 = vadd.f32 0.0, %v405
        %v407 = vpop.f32.mrb[0].mxu0
        %408 = vmatprep.mubr.bf16.mxu0 0
        %409 = vmatmul.mubr.bf16.gmra.mrb[0].mxu0 %v270
        %v410 = vpop.f32.mrb[0].mxu0
        %v411 = vadd.f32 0.0, %v410
        %v412 = vpop.f32.mrb[0].mxu0
        %v413 = vpop.f32.mrb[0].mxu0
        %v414 = vadd.f32 0.0, %v413
        %v415 = vpop.f32.mrb[0].mxu0
        %416 = vmatprep.mubr.bf16.mxu0 0
        %417 = vmatmul.mubr.bf16.gmra.mrb[0].mxu0 %v273
        %v418 = vpop.f32.mrb[0].mxu0
        %v419 = vadd.f32 0.0, %v418
        %v420 = vpop.f32.mrb[0].mxu0
        %v421 = vpop.f32.mrb[0].mxu0
        %v422 = vadd.f32 0.0, %v421
        %v423 = vpop.f32.mrb[0].mxu0
        %424 = vmatprep.mubr.bf16.mxu0 0
        %425 = vmatmul.mubr.bf16.gmra.mrb[0].mxu0 %v276
        %v426 = vpop.f32.mrb[0].mxu0
        %v427 = vadd.f32 0.0, %v426
        %v428 = vpop.f32.mrb[0].mxu0
        %v429 = vpop.f32.mrb[0].mxu0
        %v430 = vadd.f32 0.0, %v429
        %v431 = vpop.f32.mrb[0].mxu0
        %432 = vmatprep.mubr.bf16.mxu0 0
        %433 = vmatmul.mubr.bf16.gmra.mrb[0].mxu0 %v279
        %v434 = vpop.f32.mrb[0].mxu0
        %v435 = vadd.f32 0.0, %v434
        %v436 = vpop.f32.mrb[0].mxu0
        %v437 = vpop.f32.mrb[0].mxu0
        %v438 = vadd.f32 0.0, %v437
        %v439 = vpop.f32.mrb[0].mxu0
        %440 = vmatprep.mubr.bf16.mxu0 0
        %441 = vmatmul.mubr.bf16.gmra.mrb[0].mxu0 %v282
        %v442 = vpop.f32.mrb[0].mxu0
        %v443 = vadd.f32 0.0, %v442
        %v444 = vpop.f32.mrb[0].mxu0
        %v445 = vpop.f32.mrb[0].mxu0
        %v446 = vadd.f32 0.0, %v445
        %v447 = vpop.f32.mrb[0].mxu0
        %448 = vdwg.mxu0
        %449 = vst.msk [vmem:[%s183] sm:$0xff] %vm235, %v323
        %450 = vst.msk [vmem:[%s183 + $0x8] sm:$0xff] %vm235, %v326
        %451 = vst.msk [vmem:[%s183 + $0x10] sm:$0xff] %vm235, %v331
        %452 = vst.msk [vmem:[%s183 + $0x18] sm:$0xff] %vm235, %v334
        %453 = vst.msk [vmem:[%s183 + $0x20] sm:$0xff] %vm235, %v339
        %454 = vst.msk [vmem:[%s183 + $0x28] sm:$0xff] %vm235, %v342
        %455 = vst.msk [vmem:[%s183 + $0x30] sm:$0xff] %vm235, %v347
        %456 = vst.msk [vmem:[%s183 + $0x38] sm:$0xff] %vm235, %v350
        %457 = vst.msk [vmem:[%s183 + $0x40] sm:$0xff] %vm235, %v355
        %458 = vst.msk [vmem:[%s183 + $0x48] sm:$0xff] %vm235, %v358
        %459 = vst.msk [vmem:[%s183 + $0x50] sm:$0xff] %vm235, %v363
        %460 = vst.msk [vmem:[%s183 + $0x58] sm:$0xff] %vm235, %v366
        %461 = vst.msk [vmem:[%s183 + $0x60] sm:$0xff] %vm235, %v371
        %462 = vst.msk [vmem:[%s183 + $0x68] sm:$0xff] %vm235, %v374
        %463 = vst.msk [vmem:[%s183 + $0x70] sm:$0xff] %vm235, %v379
        %464 = vst.msk [vmem:[%s183 + $0x78] sm:$0xff] %vm235, %v382
        %465 = vst.msk [vmem:[%s183 + $0x80] sm:$0xff] %vm235, %v387
        %466 = vst.msk [vmem:[%s183 + $0x88] sm:$0xff] %vm235, %v390
        %467 = vst.msk [vmem:[%s183 + $0x90] sm:$0xff] %vm235, %v395
        %468 = vst.msk [vmem:[%s183 + $0x98] sm:$0xff] %vm235, %v398
        %469 = vst.msk [vmem:[%s183 + $0xa0] sm:$0xff] %vm235, %v403
        %470 = vst.msk [vmem:[%s183 + $0xa8] sm:$0xff] %vm235, %v406
        %471 = vst.msk [vmem:[%s183 + $0xb0] sm:$0xff] %vm235, %v411
        %472 = vst.msk [vmem:[%s183 + $0xb8] sm:$0xff] %vm235, %v414
        %473 = vst.msk [vmem:[%s183 + $0xc0] sm:$0xff] %vm235, %v419
        %474 = vst.msk [vmem:[%s183 + $0xc8] sm:$0xff] %vm235, %v422
        %475 = vst.msk [vmem:[%s183 + $0xd0] sm:$0xff] %vm235, %v427
        %476 = vst.msk [vmem:[%s183 + $0xd8] sm:$0xff] %vm235, %v430
        %477 = vst.msk [vmem:[%s183 + $0xe0] sm:$0xff] %vm235, %v435
        %478 = vst.msk [vmem:[%s183 + $0xe8] sm:$0xff] %vm235, %v438
        %479 = vst.msk [vmem:[%s183 + $0xf0] sm:$0xff] %vm235, %v443
        %480 = vst.msk [vmem:[%s183 + $0xf8] sm:$0xff] %vm235, %v446
        %v481 = vsel %vm235, %v323, 0.0
        %v482 = vsel %vm235, %v326, 0.0
        %v483 = vadd.f32 %v481, %v482
        %v484 = vsel %vm235, %v331, 0.0
        %v485 = vadd.f32 %v483, %v484
        %v486 = vsel %vm235, %v334, 0.0
        %v487 = vadd.f32 %v485, %v486
        %v488 = vsel %vm235, %v339, 0.0
        %v489 = vadd.f32 %v487, %v488
        %v490 = vsel %vm235, %v342, 0.0
        %v491 = vadd.f32 %v489, %v490
        %v492 = vsel %vm235, %v347, 0.0
        %v493 = vadd.f32 %v491, %v492
        %v494 = vsel %vm235, %v350, 0.0
        %v495 = vadd.f32 %v493, %v494
        %v496 = vsel %vm235, %v355, 0.0
        %v497 = vadd.f32 %v495, %v496
        %v498 = vsel %vm235, %v358, 0.0
        %v499 = vadd.f32 %v497, %v498
        %v500 = vsel %vm235, %v363, 0.0
        %v501 = vadd.f32 %v499, %v500
        %v502 = vsel %vm235, %v366, 0.0
        %v503 = vadd.f32 %v501, %v502
        %v504 = vsel %vm235, %v371, 0.0
        %v505 = vadd.f32 %v503, %v504
        %v506 = vsel %vm235, %v374, 0.0
        %v507 = vadd.f32 %v505, %v506
        %v508 = vsel %vm235, %v379, 0.0
        %v509 = vadd.f32 %v507, %v508
        %v510 = vsel %vm235, %v382, 0.0
        %v511 = vadd.f32 %v509, %v510
        %v512 = vsel %vm235, %v387, 0.0
        %v513 = vadd.f32 %v511, %v512
        %v514 = vsel %vm235, %v390, 0.0
        %v515 = vadd.f32 %v513, %v514
        %v516 = vsel %vm235, %v395, 0.0
        %v517 = vadd.f32 %v515, %v516
        %v518 = vsel %vm235, %v398, 0.0
        %v519 = vadd.f32 %v517, %v518
        %v520 = vsel %vm235, %v403, 0.0
        %v521 = vadd.f32 %v519, %v520
        %v522 = vsel %vm235, %v406, 0.0
        %v523 = vadd.f32 %v521, %v522
        %v524 = vsel %vm235, %v411, 0.0
        %v525 = vadd.f32 %v523, %v524
        %v526 = vsel %vm235, %v414, 0.0
        %v527 = vadd.f32 %v525, %v526
        %v528 = vsel %vm235, %v419, 0.0
        %v529 = vadd.f32 %v527, %v528
        %v530 = vsel %vm235, %v422, 0.0
        %v531 = vadd.f32 %v529, %v530
        %v532 = vsel %vm235, %v427, 0.0
        %v533 = vadd.f32 %v531, %v532
        %v534 = vsel %vm235, %v430, 0.0
        %v535 = vadd.f32 %v533, %v534
        %v536 = vsel %vm235, %v435, 0.0
        %v537 = vadd.f32 %v535, %v536
        %v538 = vsel %vm235, %v438, 0.0
        %v539 = vadd.f32 %v537, %v538
        %v540 = vsel %vm235, %v443, 0.0
        %v541 = vadd.f32 %v539, %v540
        %v542 = vsel %vm235, %v446, 0.0
        %v543 = vadd.f32 %v541, %v542
        %v544 = vrot.slane %v543, 4
        %v545 = vadd.f32 %v543, %v544
        %v546 = vrot.slane %v545, 2
        %v547 = vadd.f32 %v545, %v546
        %v548 = vrot.slane %v547, 1
        %v549 = vadd.f32 %v547, %v548
        %v550 = vmul.f32 %v323, %v323
        %v551 = vmul.f32 %v326, %v326
        %v552 = vmul.f32 %v331, %v331
        %v553 = vmul.f32 %v334, %v334
        %v554 = vmul.f32 %v339, %v339
        %v555 = vmul.f32 %v342, %v342
        %v556 = vmul.f32 %v347, %v347
        %v557 = vmul.f32 %v350, %v350
        %v558 = vmul.f32 %v355, %v355
        %v559 = vmul.f32 %v358, %v358
        %v560 = vmul.f32 %v363, %v363
        %v561 = vmul.f32 %v366, %v366
        %v562 = vmul.f32 %v371, %v371
        %v563 = vmul.f32 %v374, %v374
        %v564 = vmul.f32 %v379, %v379
        %v565 = vmul.f32 %v382, %v382
        %v566 = vmul.f32 %v387, %v387
        %v567 = vmul.f32 %v390, %v390
        %v568 = vmul.f32 %v395, %v395
        %v569 = vmul.f32 %v398, %v398
        %v570 = vmul.f32 %v403, %v403
        %v571 = vmul.f32 %v406, %v406
        %v572 = vmul.f32 %v411, %v411
        %v573 = vmul.f32 %v414, %v414
        %v574 = vmul.f32 %v419, %v419
        %v575 = vmul.f32 %v422, %v422
        %v576 = vmul.f32 %v427, %v427
        %v577 = vmul.f32 %v430, %v430
        %v578 = vmul.f32 %v435, %v435
        %v579 = vmul.f32 %v438, %v438
        %v580 = vmul.f32 %v443, %v443
        %v581 = vmul.f32 %v446, %v446
        %v582 = vsel %vm235, %v550, 0.0
        %v583 = vsel %vm235, %v551, 0.0
        %v584 = vadd.f32 %v582, %v583
        %v585 = vsel %vm235, %v552, 0.0
        %v586 = vadd.f32 %v584, %v585
        %v587 = vsel %vm235, %v553, 0.0
        %v588 = vadd.f32 %v586, %v587
        %v589 = vsel %vm235, %v554, 0.0
        %v590 = vadd.f32 %v588, %v589
        %v591 = vsel %vm235, %v555, 0.0
        %v592 = vadd.f32 %v590, %v591
        %v593 = vsel %vm235, %v556, 0.0
        %v594 = vadd.f32 %v592, %v593
        %v595 = vsel %vm235, %v557, 0.0
        %v596 = vadd.f32 %v594, %v595
        %v597 = vsel %vm235, %v558, 0.0
        %v598 = vadd.f32 %v596, %v597
        %v599 = vsel %vm235, %v559, 0.0
        %v600 = vadd.f32 %v598, %v599
        %v601 = vsel %vm235, %v560, 0.0
        %v602 = vadd.f32 %v600, %v601
        %v603 = vsel %vm235, %v561, 0.0
        %v604 = vadd.f32 %v602, %v603
        %v605 = vsel %vm235, %v562, 0.0
        %v606 = vadd.f32 %v604, %v605
        %v607 = vsel %vm235, %v563, 0.0
        %v608 = vadd.f32 %v606, %v607
        %v609 = vsel %vm235, %v564, 0.0
        %v610 = vadd.f32 %v608, %v609
        %v611 = vsel %vm235, %v565, 0.0
        %v612 = vadd.f32 %v610, %v611
        %v613 = vsel %vm235, %v566, 0.0
        %v614 = vadd.f32 %v612, %v613
        %v615 = vsel %vm235, %v567, 0.0
        %v616 = vadd.f32 %v614, %v615
        %v617 = vsel %vm235, %v568, 0.0
        %v618 = vadd.f32 %v616, %v617
        %v619 = vsel %vm235, %v569, 0.0
        %v620 = vadd.f32 %v618, %v619
        %v621 = vsel %vm235, %v570, 0.0
        %v622 = vadd.f32 %v620, %v621
        %v623 = vsel %vm235, %v571, 0.0
        %v624 = vadd.f32 %v622, %v623
        %v625 = vsel %vm235, %v572, 0.0
        %v626 = vadd.f32 %v624, %v625
        %v627 = vsel %vm235, %v573, 0.0
        %v628 = vadd.f32 %v626, %v627
        %v629 = vsel %vm235, %v574, 0.0
        %v630 = vadd.f32 %v628, %v629
        %v631 = vsel %vm235, %v575, 0.0
        %v632 = vadd.f32 %v630, %v631
        %v633 = vsel %vm235, %v576, 0.0
        %v634 = vadd.f32 %v632, %v633
        %v635 = vsel %vm235, %v577, 0.0
        %v636 = vadd.f32 %v634, %v635
        %v637 = vsel %vm235, %v578, 0.0
        %v638 = vadd.f32 %v636, %v637
        %v639 = vsel %vm235, %v579, 0.0
        %v640 = vadd.f32 %v638, %v639
        %v641 = vsel %vm235, %v580, 0.0
        %v642 = vadd.f32 %v640, %v641
        %v643 = vsel %vm235, %v581, 0.0
        %v644 = vadd.f32 %v642, %v643
        %v645 = vrot.slane %v644, 4
        %v646 = vadd.f32 %v644, %v645
        %v647 = vrot.slane %v646, 2
        %v648 = vadd.f32 %v646, %v647
        %v649 = vrot.slane %v648, 1
        %v650 = vadd.f32 %v648, %v649
        %vm651 = vcmask 1040384
        %v652 = vsel %vm651, %v549, %v650
        %vm653 = vcmask 25600
        %654 = vst.msk [vmem:[%s172] sm:$0x3] %vm653, %v652
        %s655 = smul.u32 32, %s18
        %p656 = scmp.lt.s32.totalorder %s655, 63
        %s657 = scalar_select %p656, %s655, 63
        %s658 = smul.addr %s657, 8
        %s659 = scalar_lea.vmem %s2, %s658
        %s660 = sand.u32 %s99, 1
        %s661 = scalar_lea.sflag [#allocation3], %s660
        %s662 = sand.u32 %s99, 1
        %s663 = smul.addr %s662, 2
        %s664 = scalar_lea.vmem [#allocation2], %s663
        // Predicated region
        $region29: #{tpu_custom_call.1} parent=27 // pred_check
          %p665 = pneg %p83
        $region30: #{tpu_custom_call.1} parent=27 // pred_check_branch
          %667 = sbr.rel (%p665) target = $region32
        $region31: #{tpu_custom_call.1} parent=27 // pred_region
          %s668 = smul.u32 32, %s18
        $region32: #{tpu_custom_call.1} parent=27 // pred_fallthru
          _
        // Predicated region
        $region33: #{tpu_custom_call.1} parent=27 // pred_check
          %p669 = pneg %p109
        $region34: #{tpu_custom_call.1} parent=27 // pred_check_branch
          %671 = sbr.rel (%p669) target = $region36
        $region35: #{tpu_custom_call.1} parent=27 // pred_region
          %s673 = ssub.s32 32, 32
          %674 = vsyncadd %s661, %s673
          %s675 = smul.addr %s18, 32
          %s676 = scalar_lea.hbm %s3, %s675
          %s678 = sshll.u32 %s664, 4
          %s679 = int_to_ptr.vmem [resolvable:$true] %s678
          %681 = dma.vmem_to_hbm [thread:$0]  %s679, 32, %s676, %s661
        $region36: #{tpu_custom_call.1} parent=27 // pred_fallthru
          _
      $region28: #{tpu_custom_call.1} parent=5 // pred_fallthru
        _
      %p682 = scmp.le.s32.totalorder 2, %s13
      // Predicated region
      $region37: #{tpu_custom_call.1} parent=5 // pred_check
        %p683 = pneg %p682
      $region38: #{tpu_custom_call.1} parent=5 // pred_check_branch
        %685 = sbr.rel (%p683) target = $region40
      $region39: #{tpu_custom_call.1} parent=5 // pred_region
        %s686 = ssub.s32 %s13, 2
        // Predicated region
        $region41: #{tpu_custom_call.1} parent=39 // pred_check
          %p687 = pneg %p89
        $region42: #{tpu_custom_call.1} parent=39 // pred_check_branch
          %689 = sbr.rel (%p687) target = $region44
        $region43: #{tpu_custom_call.1} parent=39 // pred_region
          %s690 = smul.u32 32, %s19
          %p691 = scmp.lt.s32.totalorder %s690, 63
          %s692 = scalar_select %p691, %s690, 63
          %s693 = smul.addr %s692, 8
          %s694 = scalar_lea.vmem %s2, %s693
        $region44: #{tpu_custom_call.1} parent=39 // pred_fallthru
          _
        // Predicated region
        $region45: #{tpu_custom_call.1} parent=39 // pred_check
          %p695 = pneg %p115
        $region46: #{tpu_custom_call.1} parent=39 // pred_check_branch
          %697 = sbr.rel (%p695) target = $region48
        $region47: #{tpu_custom_call.1} parent=39 // pred_region
          %s698 = sand.u32 %s100, 1
          %s699 = scalar_lea.sflag [#allocation3], %s698
          %s700 = sand.u32 %s100, 1
          %s701 = smul.addr %s700, 2
          %s702 = scalar_lea.vmem [#allocation2], %s701
          %703 = dma.done %s699, 32
        $region48: #{tpu_custom_call.1} parent=39 // pred_fallthru
          _
      $region40: #{tpu_custom_call.1} parent=5 // pred_fallthru
        _
    $region6: #{tpu_custom_call.1} parent=1 // loop_footer
      %s17 = sadd.s32 1, %s13
    $region7: #{tpu_custom_call.1} parent=1 // loop_footer_branch
      %12 = sbr.rel target = $region3
    $region8: #{tpu_custom_call.1} parent=1 // loop_exit
      _
    %704 = vsyncpa [#allocation3], 1
    %s705 = scalar_lea.sflag [#allocation3], 1
    %706 = vsyncpa %s705, 1

</llo_original>
